<compile_context>
chip_gen: v6e
topology: v6e:2x2x1
jax: 0.10.0
libtpu: 0.0.40
codegen_flags: <defaults>
</compile_context>

<pallas_src>
import numpy as np
import jax
import jax.numpy as jnp
from jax.experimental import pallas as pl
from jax.experimental.pallas import tpu as pltpu


# Largest fused kron(Mrow, Mcol) operator we keep resident in VMEM
# (single-buffered).  8 MiB + ~0.5 MiB row blocks fits the default scoped-VMEM
# budget on every generation (16 MiB v5e, 32 MiB v6e/v7x).
_KRON_MAX_OPERATOR_BYTES = 8 * 1024 * 1024


# ------------------------------------------------------------------ helpers

def _cdiv(a, b):
    return -(-a // b)


def _round_up(x, m):
    return ((x + m - 1) // m) * m


# ------------------------------------------------------------------ stage matrices (host, float64)

def _nearest_matrix(out_size: int, in_size: int) -> np.ndarray:
    """Selection matrix reproducing F.interpolate(mode='nearest')."""
    idx = np.floor(np.arange(out_size) * (in_size / out_size)).astype(np.int64)
    idx = np.minimum(idx, in_size - 1)
    m = np.zeros((out_size, in_size), np.float64)
    m[np.arange(out_size), idx] = 1.0
    return m


def _gaussian_kernel1d(ksize: int, sigma: float) -> np.ndarray:
    x = np.arange(ksize, dtype=np.float64) - (ksize - 1) / 2.0
    g = np.exp(-(x ** 2) / (2.0 * sigma ** 2))
    return g / g.sum()


def _blur_matrix(size: int, ksize: int, sigma: float) -> np.ndarray:
    """1-D gaussian blur with 'reflect' border, as a (size, size) matrix."""
    g = _gaussian_kernel1d(ksize, sigma)
    half = ksize // 2
    m = np.zeros((size, size), np.float64)
    for i in range(size):
        for k in range(ksize):
            j = i + k - half
            if j < 0:
                j = -j
            if j >= size:
                j = 2 * size - 2 - j
            m[i, j] += g[k]
    return m


def _fused_operators(H0, W0, Ht, Wt, downsample_first, downsample_frame_size,
                     blur_applied, blur_sigma, blur_kernel_size):
    """Fuse downsample -> blur -> resize into Mrow (Ht,H0) and Mcol (Wt,W0)."""
    if downsample_first and downsample_frame_size is not None:
        # Matches the PyTorch module: the only downsample branch is
        # `if self.downsample_first and exists(downsample_frame_size)`.
        Hd = Wd = int(downsample_frame_size)
        Dh = _nearest_matrix(Hd, H0)
        Dw = _nearest_matrix(Wd, W0)
    else:
        Hd, Wd = H0, W0
        Dh = np.eye(H0)
        Dw = np.eye(W0)
    if blur_applied:
        Bh = _blur_matrix(Hd, blur_kernel_size, blur_sigma)
        Bw = _blur_matrix(Wd, blur_kernel_size, blur_sigma)
    else:
        Bh = np.eye(Hd)
        Bw = np.eye(Wd)
    Uh = _nearest_matrix(Ht, Hd)
    Uw = _nearest_matrix(Wt, Wd)
    Mrow = Uh @ Bh @ Dh          # (Ht, H0)
    Mcol = Uw @ Bw @ Dw          # (Wt, W0)
    return Mrow, Mcol


def _choose_row_block(n_rows, row_bytes):
    """Rows per grid step: ~0.5 MiB of input per step (measured HBM-roofline
    sweet spot), a multiple of 8, and small enough that the grid keeps >= ~8
    steps when the frame count allows (keeps both v7x TensorCores busy)."""
    tgt = max(8, ((512 * 1024) // max(row_bytes, 1)) // 8 * 8)
    cap = max(8, _round_up(_cdiv(n_rows, 8), 8))
    return int(min(tgt, cap))


# ------------------------------------------------------------------ kernels

def _kron_kernel(x_ref, kt_ref, o_ref):
    # x: (rb, r*H0*W0)   kt: (r*H0*W0, r*Ht*Wt)   o: (rb, r*Ht*Wt)
    x = x_ref[...].astype(jnp.float32)            # native-dtype load, cast in VPU slack
    o_ref[...] = jnp.dot(x, kt_ref[...],
                         preferred_element_type=jnp.float32).astype(o_ref.dtype)


def _make_frames_kernel(tb: int):
    def kernel(x_ref, mrow_ref, mcolT_ref, o_ref):
        # x: (tb, H0, W0)   mrow: (Ht, H0)   mcolT: (W0, Wt)   o: (tb, Ht, Wt)
        mrow = mrow_ref[...]
        mcolT = mcolT_ref[...]
        for t in range(tb):                       # static unroll, tb <= 32
            x = x_ref[t].astype(jnp.float32)
            y = jnp.dot(mrow, x, preferred_element_type=jnp.float32)
            o_ref[t] = jnp.dot(y, mcolT,
                               preferred_element_type=jnp.float32).astype(o_ref.dtype)
    return kernel


# ------------------------------------------------------------------ forward paths

def _forward_kron(video, Mrow, Mcol, Ht, Wt, out_dtype):
    B, C, T, H0, W0 = video.shape
    N = B * C * T
    Fin, Fout = H0 * W0, Ht * Wt
    # Frames packed per row so both input (r*Fin) and output (r*Fout) rows are
    # lane dense (>= 128 lanes).  r == 1 for frames >= 12x12.
    r = max(1, _cdiv(128, Fin), _cdiv(128, Fout))

    K = np.kron(Mrow, Mcol)                                   # (Fout, Fin), row-major vec
    kt_blk = jnp.asarray(np.kron(np.eye(r), K.T).astype(np.float32))   # (r*Fin, r*Fout)

    n_rows = _cdiv(N, r)
    rb = _choose_row_block(n_rows, r * Fin * 4)
    grid = _cdiv(n_rows, rb)
    n_rows = grid * rb
    n_frames = n_rows * r

    x2 = video.reshape(N, Fin)                    # pure reshape of contiguous video
    if n_frames != N:                             # rare: only when shapes force a pad
        x2 = jnp.concatenate([x2, jnp.zeros((n_frames - N, Fin), x2.dtype)], axis=0)
    x2 = x2.reshape(n_rows, r * Fin)

    out2 = pl.pallas_call(
        _kron_kernel,
        out_shape=jax.ShapeDtypeStruct((n_rows, r * Fout), out_dtype),
        grid_spec=pltpu.PrefetchScalarGridSpec(
            num_scalar_prefetch=0,
            grid=(grid,),
            in_specs=[
                pl.BlockSpec((rb, r * Fin), lambda i: (i, 0)),
                # constant fused operator: same block every step, single-buffered
                pl.BlockSpec((r * Fin, r * Fout), lambda i: (0, 0),
                             pipeline_mode=pl.Buffered(1)),
            ],
            out_specs=pl.BlockSpec((rb, r * Fout), lambda i: (i, 0)),
        ),
        compiler_params=pltpu.CompilerParams(dimension_semantics=("parallel",)),
    )(x2, kt_blk)

    out = out2.reshape(n_rows * r, Ht, Wt)        # pure reshape back to frames
    if n_frames != N:
        out = out[:N]
    return out.reshape(B, C, T, Ht, Wt)


def _forward_frames(video, Mrow, Mcol, Ht, Wt, out_dtype):
    B, C, T, H0, W0 = video.shape
    N = B * C * T
    frame_bytes = H0 * W0 * video.dtype.itemsize
    # ~1 MiB of input frames per grid step, capped at 32 (unrolled loop), and
    # small enough that the grid keeps >= ~8 steps when N allows.
    tb = int(max(1, min(32, (1 << 20) // max(frame_bytes, 1), _cdiv(N, 8))))
    grid = _cdiv(N, tb)
    n_pad = grid * tb - N

    frames = video.reshape(N, H0, W0)             # pure reshape
    if n_pad:
        frames = jnp.concatenate(
            [frames, jnp.zeros((n_pad, H0, W0), frames.dtype)], axis=0)

    mrow = jnp.asarray(Mrow.astype(np.float32))   # (Ht, H0)
    mcolT = jnp.asarray(Mcol.T.astype(np.float32))  # (W0, Wt)

    out = pl.pallas_call(
        _make_frames_kernel(tb),
        out_shape=jax.ShapeDtypeStruct((grid * tb, Ht, Wt), out_dtype),
        grid_spec=pltpu.PrefetchScalarGridSpec(
            num_scalar_prefetch=0,
            grid=(grid,),
            in_specs=[
                pl.BlockSpec((tb, H0, W0), lambda i: (i, 0, 0)),
                pl.BlockSpec((Ht, H0), lambda i: (0, 0), pipeline_mode=pl.Buffered(1)),
                pl.BlockSpec((W0, Wt), lambda i: (0, 0), pipeline_mode=pl.Buffered(1)),
            ],
            out_specs=pl.BlockSpec((tb, Ht, Wt), lambda i: (i, 0, 0)),
        ),
        compiler_params=pltpu.CompilerParams(dimension_semantics=("parallel",)),
    )(frames, mrow, mcolT)

    if n_pad:
        out = out[:N]
    return out.reshape(B, C, T, Ht, Wt)


# ------------------------------------------------------------------ public wrapper

def lowres_video_conditioner_forward(video,
                                     *,
                                     target_frame_size: int,
                                     downsample_frame_size=None,
                                     downsample_first: bool = True,
                                     blur_applied: bool = True,
                                     blur_sigma: float = 0.6,
                                     blur_kernel_size: int = 3,
                                     out_dtype=None,
                                     _force_path=None):
    """Pallas implementation of LowresVideoConditioner.forward (use_noise=False).

    video: (B, C, T, H, W), any float dtype.  Returns ((B, C, T, Ht, Wt), None).
    """
    B, C, T, H0, W0 = video.shape
    Ht = Wt = int(target_frame_size)
    out_dtype = video.dtype if out_dtype is None else jnp.dtype(out_dtype)

    Mrow, Mcol = _fused_operators(H0, W0, Ht, Wt, downsample_first,
                                  downsample_frame_size, blur_applied,
                                  blur_sigma, blur_kernel_size)

    Fin, Fout = H0 * W0, Ht * Wt
    r = max(1, _cdiv(128, Fin), _cdiv(128, Fout))
    use_kron = (r * Fin) * (r * Fout) * 4 <= _KRON_MAX_OPERATOR_BYTES
    if _force_path == "kron":
        use_kron = True
    elif _force_path == "frames":
        use_kron = False

    if use_kron:
        cond_fmap = _forward_kron(video, Mrow, Mcol, Ht, Wt, out_dtype)
    else:
        cond_fmap = _forward_frames(video, Mrow, Mcol, Ht, Wt, out_dtype)

    random_noise_levels = None        # use_noise=False path
    return cond_fmap, random_noise_levels


# ------------------------------------------------------------------ pure-JAX reference

def _reference_forward(video, *, target_frame_size, downsample_frame_size,
                       blur_applied, blur_sigma, blur_kernel_size):
    B, C, T, H0, W0 = video.shape
    x = video.reshape(B * C * T, H0, W0).astype(jnp.float32)

    def nearest(x, out_h, out_w):
        in_h, in_w = x.shape[-2:]
        ih = np.minimum(np.floor(np.arange(out_h) * (in_h / out_h)).astype(np.int64), in_h - 1)
        iw = np.minimum(np.floor(np.arange(out_w) * (in_w / out_w)).astype(np.int64), in_w - 1)
        return x[:, ih][:, :, iw]

    if downsample_frame_size is not None:
        x = nearest(x, downsample_frame_size, downsample_frame_size)

    if blur_applied:
        g = _gaussian_kernel1d(blur_kernel_size, blur_sigma).astype(np.float32)
        half = blur_kernel_size // 2
        xp = jnp.pad(x, ((0, 0), (half, half), (half, half)), mode="reflect")
        H, W = x.shape[-2:]
        acc = jnp.zeros_like(x)
        for a in range(blur_kernel_size):
            for b in range(blur_kernel_size):
                acc = acc + g[a] * g[b] * xp[:, a:a + H, b:b + W]
        x = acc

    x = nearest(x, target_frame_size, target_frame_size)
    return x.reshape(B, C, T, target_frame_size, target_frame_size)


# ------------------------------------------------------------------ main

if __name__ == "__main__":
    key = jax.random.PRNGKey(0)
    B, C, T, H, W = 2, 4, 16, 16, 16
    video = jax.random.normal(key, (B, C, T, H, W), dtype=jnp.float32)

    # Deterministic stand-in for `random.random() < blur_prob`: apply the blur.
    cfg = dict(target_frame_size=16, downsample_frame_size=8,
               blur_applied=True, blur_sigma=0.6, blur_kernel_size=3)

    # Primary (fused-kron) path, jitted so the wrapper reshapes fuse away.
    fwd = jax.jit(lambda v: lowres_video_conditioner_forward(v, **cfg))
    cond_fmap, noise_levels = fwd(video)
    cond_fmap = jax.block_until_ready(cond_fmap)

    ref = _reference_forward(video, **cfg)

    assert cond_fmap.shape == (B, C, T, cfg["target_frame_size"], cfg["target_frame_size"])
    assert noise_levels is None
    np.testing.assert_allclose(np.asarray(cond_fmap), np.asarray(ref),
                               rtol=1e-4, atol=1e-4)

    # Also exercise the large-frame (two-operator) path on the same data.
    fwd_frames = jax.jit(
        lambda v: lowres_video_conditioner_forward(v, _force_path="frames", **cfg))
    cond_fmap2, _ = fwd_frames(video)
    cond_fmap2 = jax.block_until_ready(cond_fmap2)
    np.testing.assert_allclose(np.asarray(cond_fmap2), np.asarray(ref),
                               rtol=1e-4, atol=1e-4)

    print("KERNEL_OK")
</pallas_src>

<mosaic_0001>
module attributes {stable_mosaic.version = 11 : i64} {
  func.func @_kron_kernel(%arg0: i32, %arg1: memref<16x256xf32, #tpu.memory_space<vmem>>, %arg2: memref<256x256xf32, #tpu.memory_space<vmem>>, %arg3: memref<16x256xf32, #tpu.memory_space<vmem>>) attributes {dimension_semantics = [#tpu.dimension_semantics<parallel>], iteration_bounds = array<i64: 8>, scalar_prefetch = 0 : i64, scratch_operands = 0 : i64, tpu.core_type = #tpu.core_type<tc>, window_params = [{transform_indices = @transform_0, window_bounds = array<i64: 16, 256>}, {pipeline_mode = #tpu.pipeline_mode<synchronous>, transform_indices = @transform_1, window_bounds = array<i64: 256, 256>}, {transform_indices = @transform_2, window_bounds = array<i64: 16, 256>}]} {
    %c0 = arith.constant 0 : index
    %c0_0 = arith.constant 0 : index
    %0 = vector.load %arg1[%c0, %c0_0] : memref<16x256xf32, #tpu.memory_space<vmem>>, vector<16x256xf32>
    %c0_1 = arith.constant 0 : index
    %c0_2 = arith.constant 0 : index
    %1 = vector.load %arg2[%c0_1, %c0_2] : memref<256x256xf32, #tpu.memory_space<vmem>>, vector<256x256xf32>
    %cst = arith.constant dense<0.000000e+00> : vector<16x256xf32>
    %2 = tpu.matmul %0, %1, %cst {dimension_numbers = #tpu.dot_dimension_numbers<[1], [0], [0], [1], [0, 0, 1, 1], [], []>} : vector<16x256xf32>, vector<256x256xf32>, vector<16x256xf32> -> vector<16x256xf32>
    %c0_3 = arith.constant 0 : index
    %c0_4 = arith.constant 0 : index
    %3 = vector.load %arg3[%c0_3, %c0_4] : memref<16x256xf32, #tpu.memory_space<vmem>>, vector<16x256xf32>
    tpu.vector_store %arg3[%c0_3, %c0_4], %2 {strides = array<i32>} : memref<16x256xf32, #tpu.memory_space<vmem>>, vector<16x256xf32>,
    return
  }
  func.func @transform_0(%arg0: i32) -> (i32, i32) {
    %c0_i32 = arith.constant 0 : i32
    %c0_i32_0 = arith.constant 0 : i32
    return %arg0, %c0_i32 : i32, i32
  }
  func.func @transform_1(%arg0: i32) -> (i32, i32) {
    %c0_i32 = arith.constant 0 : i32
    %c0_i32_0 = arith.constant 0 : i32
    %c0_i32_1 = arith.constant 0 : i32
    return %c0_i32, %c0_i32_0 : i32, i32
  }
  func.func @transform_2(%arg0: i32) -> (i32, i32) {
    %c0_i32 = arith.constant 0 : i32
    %c0_i32_0 = arith.constant 0 : i32
    return %arg0, %c0_i32 : i32, i32
  }
}

</mosaic_0001>

<llo_original>
// kernel: _lambda_.1
$region0: #{_lambda_.1}
  #allocation0 [shape = 'u32[]', space=smem, size = 0x4, offset = 0x4, fixed_abs, tag = 'smem constant byte address 0x4 - core index']
  #allocation1 [shape = 'u32[144,128]{1,0:T(1,128)}', space=vmem, size = 0x12000, scoped, tag = 'internal scratch']
  %s0 = inlined_call_operand.vmem [shape: f32[128,256], index: 0, kind: input, shape index: {}]
  %s1 = inlined_call_operand.vmem [shape: f32[256,256], index: 1, kind: input, shape index: {}]
  %s2 = inlined_call_operand.vmem [shape: f32[128,256], index: 2, kind: output, shape index: {}]
  %s3 = sld [smem:[#allocation0]]
  $region41: #{_lambda_.1} parent=0
    _
  %s5 = ssub.s32 1, %s3
  %s6 = scalar_select 0, %s5, %s3
  loop: start=0, step=1, limit=10
  $region2: #{_lambda_.1} parent=0 // loop_pre_header
    _
  $region3: #{_lambda_.1} parent=0 // loop_header
    %s8 = sphi 0, %s12
    %p9 = scmp.ge.s32.totalorder %s8, 10
    %s18 = sphi 0, %s20
    %s21 = sphi 0, %s18
    %s22 = sphi 0, %s21
    %s38 = sphi 0, %s22
    %s42 = sphi 0, %s42
    %s44 = sphi 0, %s42
    %s45 = sphi 0, %s44
    %s59 = sphi 0, %s45
    %s65 = sphi 0, %s67
    %s68 = sphi 0, %s65
    %s69 = sphi 0, %s68
    %s85 = sphi 0, %s69
  $region4: #{_lambda_.1} parent=0 // loop_header_branch
    %11 = sbr.rel (%p9) target = $region8
  $region5: #{_lambda_.1} parent=0 // loop_body
    %s13 = ssub.s32 %s8, 1
    %s14 = ssub.s32 %s8, 2
    %s15 = sadd.s32 %s8, 1
    %s16 = ssub.s32 %s8, %s15
    %p17 = scmp.eq.s32.totalorder %s16, 0
    %s19 = sadd.s32 %s18, 1
    %s20 = scalar_select %p17, %s18, %s19
    %p23 = pneg %p17
    %p24 = scmp.eq.s32.totalorder %s8, 7
    %p25 = por %p23, %p24
    %p26 = scmp.ne.s32.totalorder %s18, %s21
    %p27 = scmp.eq.s32.totalorder %s8, 0
    %p28 = por %p26, %p27
    %p29 = scmp.ne.s32.totalorder %s18, %s21
    %p30 = scmp.eq.s32.totalorder %s13, 7
    %p31 = por %p29, %p30
    %p32 = scmp.ne.s32.totalorder %s21, %s22
    %p33 = scmp.eq.s32.totalorder %s13, 0
    %p34 = por %p32, %p33
    %p35 = scmp.ne.s32.totalorder %s21, %s22
    %p36 = scmp.eq.s32.totalorder %s14, 7
    %p37 = por %p35, %p36
    %p39 = scmp.ne.s32.totalorder %s22, %s38
    %p40 = scmp.eq.s32.totalorder %s14, 0
    %p41 = por %p39, %p40
    %s43 = sadd.s32 %s42, 1
    %p46 = scmp.eq.s32.totalorder %s8, 7
    %p47 = scmp.ne.s32.totalorder %s42, %s44
    %p48 = scmp.eq.s32.totalorder %s8, 0
    %p49 = por %p47, %p48
    %p50 = scmp.ne.s32.totalorder %s42, %s44
    %p51 = scmp.eq.s32.totalorder %s13, 7
    %p52 = por %p50, %p51
    %p53 = scmp.ne.s32.totalorder %s44, %s45
    %p54 = scmp.eq.s32.totalorder %s13, 0
    %p55 = por %p53, %p54
    %p56 = scmp.ne.s32.totalorder %s44, %s45
    %p57 = scmp.eq.s32.totalorder %s14, 7
    %p58 = por %p56, %p57
    %p60 = scmp.ne.s32.totalorder %s45, %s59
    %p61 = scmp.eq.s32.totalorder %s14, 0
    %p62 = por %p60, %p61
    %s63 = ssub.s32 %s8, %s15
    %p64 = scmp.eq.s32.totalorder %s63, 0
    %s66 = sadd.s32 %s65, 1
    %s67 = scalar_select %p64, %s65, %s66
    %p70 = pneg %p64
    %p71 = scmp.eq.s32.totalorder %s8, 7
    %p72 = por %p70, %p71
    %p73 = scmp.ne.s32.totalorder %s65, %s68
    %p74 = scmp.eq.s32.totalorder %s8, 0
    %p75 = por %p73, %p74
    %p76 = scmp.ne.s32.totalorder %s65, %s68
    %p77 = scmp.eq.s32.totalorder %s13, 7
    %p78 = por %p76, %p77
    %p79 = scmp.ne.s32.totalorder %s68, %s69
    %p80 = scmp.eq.s32.totalorder %s13, 0
    %p81 = por %p79, %p80
    %p82 = scmp.ne.s32.totalorder %s68, %s69
    %p83 = scmp.eq.s32.totalorder %s14, 7
    %p84 = por %p82, %p83
    %p86 = scmp.ne.s32.totalorder %s69, %s85
    %p87 = scmp.eq.s32.totalorder %s14, 0
    %p88 = por %p86, %p87
    %p89 = scmp.le.s32.totalorder 1, %s8
    %p90 = scmp.lt.s32.totalorder %s8, 9
    %p91 = pnand %p89, %p90
    %p92 = pneg %p91
    // Predicated region
    $region9: #{_lambda_.1} parent=5 // pred_check
      _
    $region10: #{_lambda_.1} parent=5 // pred_check_branch
      %94 = sbr.rel (%p91) target = $region12
    $region11: #{_lambda_.1} parent=5 // pred_region
      %s95 = ssub.s32 %s8, 1
      // Predicated region
      $region13: #{_lambda_.1} parent=11 // pred_check
        %p96 = pneg %p55
      $region14: #{_lambda_.1} parent=11 // pred_check_branch
        %98 = sbr.rel (%p96) target = $region16
      $region15: #{_lambda_.1} parent=11 // pred_region
        _
      $region16: #{_lambda_.1} parent=11 // pred_fallthru
        _
    $region12: #{_lambda_.1} parent=5 // pred_fallthru
      _
    %p99 = scmp.lt.s32.totalorder %s8, 8
    // Predicated region
    $region17: #{_lambda_.1} parent=5 // pred_check
      %p100 = pneg %p99
    $region18: #{_lambda_.1} parent=5 // pred_check_branch
      %102 = sbr.rel (%p100) target = $region20
    $region19: #{_lambda_.1} parent=5 // pred_region
      // Predicated region
      $region21: #{_lambda_.1} parent=19 // pred_check
        %p103 = pneg %p28
      $region22: #{_lambda_.1} parent=19 // pred_check_branch
        %105 = sbr.rel (%p103) target = $region24
      $region23: #{_lambda_.1} parent=19 // pred_region
        %s106 = smul.u32 2, %s8
        %p107 = scmp.lt.s32.totalorder %s106, 15
        %s108 = scalar_select %p107, %s106, 15
        %s109 = smul.addr %s108, 2
        %s110 = smul.addr %s109, 8
        %s111 = scalar_lea.vmem %s0, %s110
        %s112 = smul.u32 2, %s8
      $region24: #{_lambda_.1} parent=19 // pred_fallthru
        _
    $region20: #{_lambda_.1} parent=5 // pred_fallthru
      _
    %p113 = scmp.le.s32.totalorder 1, %s8
    %p114 = scmp.lt.s32.totalorder %s8, 9
    %p115 = pnand %p113, %p114
    %p116 = pneg %p115
    // Predicated region
    $region25: #{_lambda_.1} parent=5 // pred_check
      _
    $region26: #{_lambda_.1} parent=5 // pred_check_branch
      %118 = sbr.rel (%p115) target = $region28
    $region27: #{_lambda_.1} parent=5 // pred_region
      %s119 = ssub.s32 %s8, 1
      %s120 = smul.u32 2, %s13
      %p121 = scmp.lt.s32.totalorder %s120, 15
      %s122 = scalar_select %p121, %s120, 15
      %s123 = smul.addr %s122, 2
      %s124 = smul.addr %s123, 8
      %s125 = scalar_lea.vmem %s0, %s124
      %p126 = pneg %p34
      %p127 = pneg %p31
      %p128 = pneg %p55
      %p129 = pneg %p52
      %p130 = pneg %p81
      %p131 = pneg %p78
      %s132 = smul.u32 2, %s13
      %p133 = scmp.lt.s32.totalorder %s132, 15
      %s134 = scalar_select %p133, %s132, 15
      %s135 = smul.addr %s134, 2
      %s136 = smul.addr %s135, 8
      %s137 = scalar_lea.vmem %s2, %s136
      %s138 = smul.u32 2, %s13
      %p139 = scmp.lt.s32.totalorder %s138, 15
      %s140 = scalar_select %p139, %s138, 15
      %s141 = smul.addr %s140, 2
      %s142 = smul.addr %s141, 8
      %s143 = scalar_lea.vmem %s0, %s142
      %s144 = smul.u32 2, %s13
      %s145 = smul.u32 2, %s13
      %p146 = scmp.lt.s32.totalorder %s145, 15
      %s147 = scalar_select %p146, %s145, 15
      %s148 = smul.addr %s147, 2
      %s149 = smul.addr %s148, 8
      %s150 = scalar_lea.vmem %s2, %s149
      %s151 = smul.u32 2, %s13
      %v152 = vld [vmem:[%s143] sm:$0xff]
      %v153 = vld [vmem:[%s143 + $0x8] sm:$0xff]
      %v154 = vld [vmem:[%s143 + $0x10] sm:$0xff]
      %v155 = vld [vmem:[%s143 + $0x18] sm:$0xff]
      %v156 = vld [vmem:[%s1] sm:$0xff]
      %v157 = vld [vmem:[%s1 + $0x8] sm:$0xff]
      %v158 = vld [vmem:[%s1 + $0x10] sm:$0xff]
      %v159 = vld [vmem:[%s1 + $0x18] sm:$0xff]
      %v160 = vld [vmem:[%s1 + $0x20] sm:$0xff]
      %v161 = vld [vmem:[%s1 + $0x28] sm:$0xff]
      %v162 = vld [vmem:[%s1 + $0x30] sm:$0xff]
      %v163 = vld [vmem:[%s1 + $0x38] sm:$0xff]
      %v164 = vld [vmem:[%s1 + $0x40] sm:$0xff]
      %v165 = vld [vmem:[%s1 + $0x48] sm:$0xff]
      %v166 = vld [vmem:[%s1 + $0x50] sm:$0xff]
      %v167 = vld [vmem:[%s1 + $0x58] sm:$0xff]
      %v168 = vld [vmem:[%s1 + $0x60] sm:$0xff]
      %v169 = vld [vmem:[%s1 + $0x68] sm:$0xff]
      %v170 = vld [vmem:[%s1 + $0x70] sm:$0xff]
      %v171 = vld [vmem:[%s1 + $0x78] sm:$0xff]
      %v172 = vld [vmem:[%s1 + $0x80] sm:$0xff]
      %v173 = vld [vmem:[%s1 + $0x88] sm:$0xff]
      %v174 = vld [vmem:[%s1 + $0x90] sm:$0xff]
      %v175 = vld [vmem:[%s1 + $0x98] sm:$0xff]
      %v176 = vld [vmem:[%s1 + $0xa0] sm:$0xff]
      %v177 = vld [vmem:[%s1 + $0xa8] sm:$0xff]
      %v178 = vld [vmem:[%s1 + $0xb0] sm:$0xff]
      %v179 = vld [vmem:[%s1 + $0xb8] sm:$0xff]
      %v180 = vld [vmem:[%s1 + $0xc0] sm:$0xff]
      %v181 = vld [vmem:[%s1 + $0xc8] sm:$0xff]
      %v182 = vld [vmem:[%s1 + $0xd0] sm:$0xff]
      %v183 = vld [vmem:[%s1 + $0xd8] sm:$0xff]
      %v184 = vld [vmem:[%s1 + $0xe0] sm:$0xff]
      %v185 = vld [vmem:[%s1 + $0xe8] sm:$0xff]
      %v186 = vld [vmem:[%s1 + $0xf0] sm:$0xff]
      %v187 = vld [vmem:[%s1 + $0xf8] sm:$0xff]
      %v188 = vld [vmem:[%s1 + $0x100] sm:$0xff]
      %v189 = vld [vmem:[%s1 + $0x108] sm:$0xff]
      %v190 = vld [vmem:[%s1 + $0x110] sm:$0xff]
      %v191 = vld [vmem:[%s1 + $0x118] sm:$0xff]
      %v192 = vld [vmem:[%s1 + $0x120] sm:$0xff]
      %v193 = vld [vmem:[%s1 + $0x128] sm:$0xff]
      %v194 = vld [vmem:[%s1 + $0x130] sm:$0xff]
      %v195 = vld [vmem:[%s1 + $0x138] sm:$0xff]
      %v196 = vld [vmem:[%s1 + $0x140] sm:$0xff]
      %v197 = vld [vmem:[%s1 + $0x148] sm:$0xff]
      %v198 = vld [vmem:[%s1 + $0x150] sm:$0xff]
      %v199 = vld [vmem:[%s1 + $0x158] sm:$0xff]
      %v200 = vld [vmem:[%s1 + $0x160] sm:$0xff]
      %v201 = vld [vmem:[%s1 + $0x168] sm:$0xff]
      %v202 = vld [vmem:[%s1 + $0x170] sm:$0xff]
      %v203 = vld [vmem:[%s1 + $0x178] sm:$0xff]
      %v204 = vld [vmem:[%s1 + $0x180] sm:$0xff]
      %v205 = vld [vmem:[%s1 + $0x188] sm:$0xff]
      %v206 = vld [vmem:[%s1 + $0x190] sm:$0xff]
      %v207 = vld [vmem:[%s1 + $0x198] sm:$0xff]
      %v208 = vld [vmem:[%s1 + $0x1a0] sm:$0xff]
      %v209 = vld [vmem:[%s1 + $0x1a8] sm:$0xff]
      %v210 = vld [vmem:[%s1 + $0x1b0] sm:$0xff]
      %v211 = vld [vmem:[%s1 + $0x1b8] sm:$0xff]
      %v212 = vld [vmem:[%s1 + $0x1c0] sm:$0xff]
      %v213 = vld [vmem:[%s1 + $0x1c8] sm:$0xff]
      %v214 = vld [vmem:[%s1 + $0x1d0] sm:$0xff]
      %v215 = vld [vmem:[%s1 + $0x1d8] sm:$0xff]
      %v216 = vld [vmem:[%s1 + $0x1e0] sm:$0xff]
      %v217 = vld [vmem:[%s1 + $0x1e8] sm:$0xff]
      %v218 = vld [vmem:[%s1 + $0x1f0] sm:$0xff]
      %v219 = vld [vmem:[%s1 + $0x1f8] sm:$0xff]
      %220 = vmatprep.subr.mxu0 %v187
      %221 = vmatpush1.msra.mxu0 %v186
      %222 = vmatprep.subr.mxu0 %v185
      %223 = vmatpush1.msra.mxu0 %v184
      %224 = vmatprep.subr.mxu0 %v183
      %225 = vmatpush1.msra.mxu0 %v182
      %226 = vmatprep.subr.mxu0 %v181
      %227 = vmatpush1.msra.mxu0 %v180
      %228 = vmatprep.subr.mxu0 %v179
      %229 = vmatpush1.msra.mxu0 %v178
      %230 = vmatprep.subr.mxu0 %v177
      %231 = vmatpush1.msra.mxu0 %v176
      %232 = vmatprep.subr.mxu0 %v175
      %233 = vmatpush1.msra.mxu0 %v174
      %234 = vmatprep.subr.mxu0 %v173
      %235 = vmatpush1.msra.mxu0 %v172
      %236 = vmatprep.subr.mxu0 %v171
      %237 = vmatpush1.msra.mxu0 %v170
      %238 = vmatprep.subr.mxu0 %v169
      %239 = vmatpush1.msra.mxu0 %v168
      %240 = vmatprep.subr.mxu0 %v167
      %241 = vmatpush1.msra.mxu0 %v166
      %242 = vmatprep.subr.mxu0 %v165
      %243 = vmatpush1.msra.mxu0 %v164
      %244 = vmatprep.subr.mxu0 %v163
      %245 = vmatpush1.msra.mxu0 %v162
      %246 = vmatprep.subr.mxu0 %v161
      %247 = vmatpush1.msra.mxu0 %v160
      %248 = vmatprep.subr.mxu0 %v159
      %249 = vmatpush1.msra.mxu0 %v158
      %250 = vmatprep.subr.mxu0 %v157
      %251 = vmatpush1.msra.mxu0 %v156
      %252 = vmatprep.subr.mxu0 %v219
      %253 = vmatpush2.msra.mxu0 %v218
      %254 = vmatprep.subr.mxu0 %v217
      %255 = vmatpush2.msra.mxu0 %v216
      %256 = vmatprep.subr.mxu0 %v215
      %257 = vmatpush2.msra.mxu0 %v214
      %258 = vmatprep.subr.mxu0 %v213
      %259 = vmatpush2.msra.mxu0 %v212
      %260 = vmatprep.subr.mxu0 %v211
      %261 = vmatpush2.msra.mxu0 %v210
      %262 = vmatprep.subr.mxu0 %v209
      %263 = vmatpush2.msra.mxu0 %v208
      %264 = vmatprep.subr.mxu0 %v207
      %265 = vmatpush2.msra.mxu0 %v206
      %266 = vmatprep.subr.mxu0 %v205
      %267 = vmatpush2.msra.mxu0 %v204
      %268 = vmatprep.subr.mxu0 %v203
      %269 = vmatpush2.msra.mxu0 %v202
      %270 = vmatprep.subr.mxu0 %v201
      %271 = vmatpush2.msra.mxu0 %v200
      %272 = vmatprep.subr.mxu0 %v199
      %273 = vmatpush2.msra.mxu0 %v198
      %274 = vmatprep.subr.mxu0 %v197
      %275 = vmatpush2.msra.mxu0 %v196
      %276 = vmatprep.subr.mxu0 %v195
      %277 = vmatpush2.msra.mxu0 %v194
      %278 = vmatprep.subr.mxu0 %v193
      %279 = vmatpush2.msra.mxu0 %v192
      %280 = vmatprep.subr.mxu0 %v191
      %281 = vmatpush2.msra.mxu0 %v190
      %282 = vmatprep.subr.mxu0 %v189
      %283 = vmatpush2.msra.mxu0 %v188
      %284 = vmatprep.mubr.f32.mxu0 %v153
      %285 = vmatmul.mubr.f32.gmra.mxu0 %v152
      %v286 = vpop.f32.mrf.mxu0
      %v287 = vadd.f32 0.0, %v286
      %v288 = vpop.f32.mrf.mxu0
      %v289 = vadd.f32 0.0, %v288
      %290 = vmatprep.mubr.f32.mxu0 %v155
      %291 = vmatmul.mubr.f32.gmra.mxu0 %v154
      %v292 = vpop.f32.mrf.mxu0
      %v293 = vadd.f32 0.0, %v292
      %v294 = vpop.f32.mrf.mxu0
      %v295 = vadd.f32 0.0, %v294
      %296 = vdwg.mxu0
      %297 = vst [vmem:[%s150] sm:$0xff] %v287
      %298 = vst [vmem:[%s150 + $0x8] sm:$0xff] %v289
      %299 = vst [vmem:[%s150 + $0x10] sm:$0xff] %v293
      %300 = vst [vmem:[%s150 + $0x18] sm:$0xff] %v295
      %s301 = smul.u32 2, %s13
      %p302 = scmp.lt.s32.totalorder %s301, 15
      %s303 = scalar_select %p302, %s301, 15
      %s304 = smul.addr %s303, 2
      %s305 = smul.addr %s304, 8
      %s306 = scalar_lea.vmem %s2, %s305
      // Predicated region
      $region29: #{_lambda_.1} parent=27 // pred_check
        %p307 = pneg %p78
      $region30: #{_lambda_.1} parent=27 // pred_check_branch
        %309 = sbr.rel (%p307) target = $region32
      $region31: #{_lambda_.1} parent=27 // pred_region
        %s310 = smul.u32 2, %s13
      $region32: #{_lambda_.1} parent=27 // pred_fallthru
        _
    $region28: #{_lambda_.1} parent=5 // pred_fallthru
      _
    %p311 = scmp.le.s32.totalorder 2, %s8
    // Predicated region
    $region33: #{_lambda_.1} parent=5 // pred_check
      %p312 = pneg %p311
    $region34: #{_lambda_.1} parent=5 // pred_check_branch
      %314 = sbr.rel (%p312) target = $region36
    $region35: #{_lambda_.1} parent=5 // pred_region
      %s315 = ssub.s32 %s8, 2
      // Predicated region
      $region37: #{_lambda_.1} parent=35 // pred_check
        %p316 = pneg %p84
      $region38: #{_lambda_.1} parent=35 // pred_check_branch
        %318 = sbr.rel (%p316) target = $region40
      $region39: #{_lambda_.1} parent=35 // pred_region
        %s319 = smul.u32 2, %s14
        %p320 = scmp.lt.s32.totalorder %s319, 15
        %s321 = scalar_select %p320, %s319, 15
        %s322 = smul.addr %s321, 2
        %s323 = smul.addr %s322, 8
        %s324 = scalar_lea.vmem %s2, %s323
      $region40: #{_lambda_.1} parent=35 // pred_fallthru
        _
    $region36: #{_lambda_.1} parent=5 // pred_fallthru
      _
  $region6: #{_lambda_.1} parent=0 // loop_footer
    %s12 = sadd.s32 1, %s8
  $region7: #{_lambda_.1} parent=0 // loop_footer_branch
    %7 = sbr.rel target = $region3
  $region8: #{_lambda_.1} parent=0 // loop_exit
    _

</llo_original>
